<compile_context>
chip_gen: v5e
topology: v5e:2x2
jax: 0.10.0
libtpu: 0.0.40
codegen_flags: <defaults>
</compile_context>

<pallas_src>
import jax
import jax.numpy as jnp
from jax.experimental import pallas as pl
from jax.experimental.pallas import tpu as pltpu


def _round_up(x, m):
    return (x + m - 1) // m * m


def _vmem_bytes(tm, tn, kp, in_bytes, out_bytes):
    """Double-buffered VMEM footprint of one grid step's blocks."""
    return 2 * (tm * kp * in_bytes      # patch tile
                + kp * tn * in_bytes    # weight (resident)
                + tn * 4                # bias
                + tm * tn * out_bytes)  # output tile


# ----------------------------- Pallas kernel -----------------------------
def _patch_proj_kernel(x_ref, w_ref, b_ref, o_ref):
    """One (tm, tn) output tile, full K in a single dot.

    x_ref: (tm, Kp) bf16 patch tile (streamed over the M grid axis)
    w_ref: (Kp, tn) bf16 weight (index_map has no M dependence -> resident)
    b_ref: (1, tn)  f32 bias
    o_ref: (tm, tn) output tile
    """
    acc = jnp.dot(x_ref[...], w_ref[...], preferred_element_type=jnp.float32)
    o_ref[...] = (acc + b_ref[...]).astype(o_ref.dtype)


def patch_proj(patches, weight_kn, bias, *,
               out_dtype=jnp.float32, compute_dtype=jnp.bfloat16,
               tm_max=512, tn_max=2048, force_pallas=False,
               vmem_budget=40 * 1024 * 1024):
    """patches: (M, K), weight_kn: (K, N), bias: (N,) -> (M, N) in out_dtype."""
    M, K = patches.shape
    Kw, N = weight_kn.shape
    assert K == Kw, (K, Kw)

    # Small-problem fallback: kernel launch + pipeline overhead dominates, the
    # 256x256 MXU is mostly idle, and padding N/K to 128 wastes lanes.
    if not force_pallas and (M * K * N) < (1 << 21):
        acc = jnp.dot(patches.astype(compute_dtype),
                      weight_kn.astype(compute_dtype),
                      preferred_element_type=jnp.float32)
        return (acc + bias.astype(jnp.float32)).astype(out_dtype)

    in_bytes = jnp.dtype(compute_dtype).itemsize
    out_bytes = jnp.dtype(out_dtype).itemsize

    Kp = _round_up(K, 128)
    Np = _round_up(N, 128)

    # N: a single lane-dense tile whenever embed_dim is a normal ViT width, so
    # the weight is DMA'd once and stays VMEM-resident for the whole call.
    if Np <= tn_max:
        tn = Np
    else:  # very wide embed_dim: tile N; weight index_map still has no M dep.
        tn = tn_max
        Np = _round_up(N, tn)

    # M: big, 16-aligned tiles (bf16 sublane packing) under the VMEM budget.
    tm = max(16, min(tm_max, _round_up(M, 16)))
    while tm > 16 and _vmem_bytes(tm, tn, Kp, in_bytes, out_bytes) > vmem_budget:
        tm -= 16
    Mp = _round_up(M, tm)
    # Keep >= 2 steps on the parallel M axis when possible (v7x has 2 TCs).
    if Mp // tm == 1 and tm > 128:
        tm = _round_up((M + 1) // 2, 16)
        Mp = _round_up(M, tm)

    xp = patches.astype(compute_dtype)
    wp = weight_kn.astype(compute_dtype)
    if (Mp, Kp) != (M, K):
        xp = jnp.pad(xp, ((0, Mp - M), (0, Kp - K)))
    if (Kp, Np) != (K, N):
        wp = jnp.pad(wp, ((0, Kp - K), (0, Np - N)))
    bp = bias.astype(jnp.float32)
    if Np != N:
        bp = jnp.pad(bp, (0, Np - N))
    bp = bp.reshape(1, Np)

    grid = (Mp // tm, Np // tn)

    # Every operand is now read exactly once, so the estimate matches traffic.
    cost = pl.CostEstimate(
        flops=2 * Mp * Kp * Np,
        transcendentals=0,
        bytes_accessed=(Mp * Kp + Kp * Np) * in_bytes + Mp * Np * out_bytes + Np * 4,
    )

    vmem_need = _vmem_bytes(tm, tn, Kp, in_bytes, out_bytes)
    vmem_limit = int(min(max(vmem_need + (4 << 20), 32 << 20), 56 << 20))

    out = pl.pallas_call(
        _patch_proj_kernel,
        out_shape=jax.ShapeDtypeStruct((Mp, Np), out_dtype),
        grid_spec=pltpu.PrefetchScalarGridSpec(
            num_scalar_prefetch=0,
            grid=grid,
            in_specs=[
                # Patch tile: depends only on i -> fetched once per M tile
                # (index unchanged across the inner N axis => no re-DMA).
                pl.BlockSpec((tm, Kp), lambda i, j: (i, 0)),
                # Weight: no M dependence; with grid_n == 1 it is DMA'd once
                # and stays resident in VMEM for the entire call.
                pl.BlockSpec((Kp, tn), lambda i, j: (0, j)),
                # Bias.
                pl.BlockSpec((1, tn), lambda i, j: (0, j)),
            ],
            out_specs=pl.BlockSpec((tm, tn), lambda i, j: (i, j)),
        ),
        compiler_params=pltpu.CompilerParams(
            dimension_semantics=("parallel", "parallel"),
            vmem_limit_bytes=vmem_limit),
        cost_estimate=cost,
    )(xp, wp, bp)

    if (Mp, Np) != (M, N):
        out = out[:M, :N]     # drop padded rows/cols; padded garbage never exposed
    return out


# ----------------------------- Module wrapper -----------------------------
class PatchEmbed2D:
    """Image to Patch Embedding (Pallas TPU)."""

    def __init__(self, img_size=16, patch_size=4, in_chans=4, embed_dim=32,
                 key=None, compute_dtype=jnp.bfloat16, out_dtype=jnp.float32,
                 force_pallas=False):
        self.img_size = (img_size, img_size)
        self.patch_size = (patch_size, patch_size)
        self.num_patches = (img_size // patch_size) * (img_size // patch_size)
        self.in_chans = in_chans
        self.embed_dim = embed_dim
        self.compute_dtype = compute_dtype
        # out_dtype=jnp.bfloat16 halves the output HBM write stream if the
        # downstream consumer (pos-embed / LayerNorm) accepts it.
        self.out_dtype = out_dtype
        self.force_pallas = force_pallas

        if key is None:
            key = jax.random.PRNGKey(0)
        kw, kb = jax.random.split(key)
        # Conv2d weight: (embed_dim, in_chans, ph, pw); kaiming-uniform-style init.
        fan_in = in_chans * patch_size * patch_size
        bound = 1.0 / (fan_in ** 0.5)
        self.weight = jax.random.uniform(
            kw, (embed_dim, in_chans, patch_size, patch_size),
            minval=-bound, maxval=bound, dtype=jnp.float32)
        self.bias = jax.random.uniform(
            kb, (embed_dim,), minval=-bound, maxval=bound, dtype=jnp.float32)
        # Pre-flattened matmul operand (K, N) = (C*ph*pw, embed_dim), OIHW order.
        self.w_kn = self.weight.reshape(embed_dim, fan_in).T

    def __call__(self, x):
        B, C, H, W = x.shape
        assert H == self.img_size[0] and W == self.img_size[1], (
            f"Input image size ({H}*{W}) doesn't match model "
            f"({self.img_size[0]}*{self.img_size[1]}).")
        ph, pw = self.patch_size
        gh, gw = H // ph, W // pw

        # Patch extraction (per-patch vector ordered (C, kh, kw) to match OIHW
        # weight flattening). Cast to the compute dtype *before* the transpose
        # so the materialized copy is half the HBM bytes.
        # TODO(synk): fold the patch gather into the kernel (strided DMA from
        # the NCHW HBM view) to remove this materialized transpose.
        xq = x.astype(self.compute_dtype)
        xq = xq.reshape(B, C, gh, ph, gw, pw)
        xq = jnp.transpose(xq, (0, 2, 4, 1, 3, 5))        # (B, gh, gw, C, ph, pw)
        patches = xq.reshape(B * gh * gw, C * ph * pw)    # (M, K)

        out = patch_proj(patches, self.w_kn, self.bias,
                         out_dtype=self.out_dtype,
                         compute_dtype=self.compute_dtype,
                         force_pallas=self.force_pallas)
        return out.reshape(B, gh * gw, self.embed_dim)    # (B, num_patches, D)


# ----------------------------- Demo / check -----------------------------
if __name__ == "__main__":
    key = jax.random.PRNGKey(0)
    k_x, k_p = jax.random.split(key)

    B, C, H, W = 2, 4, 16, 16
    patch = 4
    embed_dim = 32

    x = jax.random.normal(k_x, (B, C, H, W), dtype=jnp.float32)

    # force_pallas=True so the demo exercises the Pallas kernel even though
    # these shapes are below the small-problem fallback threshold.
    model = PatchEmbed2D(img_size=H, patch_size=patch, in_chans=C,
                         embed_dim=embed_dim, key=k_p, force_pallas=True)
    out = jax.block_until_ready(model(x))
    assert out.shape == (B, model.num_patches, embed_dim), out.shape

    def conv_ref(xi, wi):
        r = jax.lax.conv_general_dilated(
            xi, wi, window_strides=(patch, patch), padding="VALID",
            dimension_numbers=("NCHW", "OIHW", "NCHW"))
        r = r + model.bias.reshape(1, embed_dim, 1, 1)
        return r.reshape(B, embed_dim, -1).transpose(0, 2, 1)

    # Tight check: same bf16-rounded inputs, f32 accumulation (kernel math).
    ref_bf = conv_ref(x.astype(jnp.bfloat16).astype(jnp.float32),
                      model.weight.astype(jnp.bfloat16).astype(jnp.float32))
    assert jnp.allclose(out, ref_bf, atol=1e-3, rtol=1e-3), "mismatch vs bf16-rounded conv"

    # Module-semantics check: full-f32 conv, bf16-level tolerance.
    ref = conv_ref(x, model.weight)
    assert jnp.allclose(out, ref, atol=5e-2, rtol=5e-2), "mismatch vs f32 conv reference"

    # Small-problem fallback path (plain fused dot) agrees with the kernel path.
    model.force_pallas = False
    out_fb = jax.block_until_ready(model(x))
    assert jnp.allclose(out, out_fb, atol=2e-3, rtol=2e-3), "fallback path mismatch"

    print("KERNEL_OK")
</pallas_src>

<mosaic_0001>
module attributes {stable_mosaic.version = 11 : i64} {
  func.func @_patch_proj_kernel(%arg0: i32, %arg1: i32, %arg2: memref<32x128xbf16, #tpu.memory_space<vmem>>, %arg3: memref<128x128xbf16, #tpu.memory_space<vmem>>, %arg4: memref<1x128xf32, #tpu.memory_space<vmem>>, %arg5: memref<32x128xf32, #tpu.memory_space<vmem>>) attributes {dimension_semantics = [#tpu.dimension_semantics<parallel>, #tpu.dimension_semantics<parallel>], iteration_bounds = array<i64: 1, 1>, scalar_prefetch = 0 : i64, scratch_operands = 0 : i64, tpu.core_type = #tpu.core_type<tc>, window_params = [{transform_indices = @transform_0, window_bounds = array<i64: 32, 128>}, {transform_indices = @transform_1, window_bounds = array<i64: 128, 128>}, {transform_indices = @transform_2, window_bounds = array<i64: 1, 128>}, {transform_indices = @transform_3, window_bounds = array<i64: 32, 128>}]} {
    %c0 = arith.constant 0 : index
    %c0_0 = arith.constant 0 : index
    %0 = vector.load %arg2[%c0, %c0_0] : memref<32x128xbf16, #tpu.memory_space<vmem>>, vector<32x128xbf16>
    %c0_1 = arith.constant 0 : index
    %c0_2 = arith.constant 0 : index
    %1 = vector.load %arg3[%c0_1, %c0_2] : memref<128x128xbf16, #tpu.memory_space<vmem>>, vector<128x128xbf16>
    %cst = arith.constant dense<0.000000e+00> : vector<32x128xf32>
    %2 = tpu.matmul %0, %1, %cst {dimension_numbers = #tpu.dot_dimension_numbers<[1], [0], [0], [1], [0, 0, 1, 1], [], []>} : vector<32x128xbf16>, vector<128x128xbf16>, vector<32x128xf32> -> vector<32x128xf32>
    %c0_3 = arith.constant 0 : index
    %c0_4 = arith.constant 0 : index
    %3 = vector.load %arg4[%c0_3, %c0_4] : memref<1x128xf32, #tpu.memory_space<vmem>>, vector<1x128xf32>
    %4 = vector.broadcast %3 : vector<1x128xf32> to vector<32x128xf32>
    %5 = arith.addf %2, %4 : vector<32x128xf32>
    %c0_5 = arith.constant 0 : index
    %c0_6 = arith.constant 0 : index
    %6 = vector.load %arg5[%c0_5, %c0_6] : memref<32x128xf32, #tpu.memory_space<vmem>>, vector<32x128xf32>
    tpu.vector_store %arg5[%c0_5, %c0_6], %5 {strides = array<i32>} : memref<32x128xf32, #tpu.memory_space<vmem>>, vector<32x128xf32>,
    return
  }
  func.func @transform_0(%arg0: i32, %arg1: i32) -> (i32, i32) {
    %c0_i32 = arith.constant 0 : i32
    %c0_i32_0 = arith.constant 0 : i32
    return %arg0, %c0_i32 : i32, i32
  }
  func.func @transform_1(%arg0: i32, %arg1: i32) -> (i32, i32) {
    %c0_i32 = arith.constant 0 : i32
    %c0_i32_0 = arith.constant 0 : i32
    return %c0_i32, %arg1 : i32, i32
  }
  func.func @transform_2(%arg0: i32, %arg1: i32) -> (i32, i32) {
    %c0_i32 = arith.constant 0 : i32
    %c0_i32_0 = arith.constant 0 : i32
    return %c0_i32, %arg1 : i32, i32
  }
  func.func @transform_3(%arg0: i32, %arg1: i32) -> (i32, i32) {
    %c0_i32 = arith.constant 0 : i32
    return %arg0, %arg1 : i32, i32
  }
}

</mosaic_0001>

<llo_original>
// kernel: tpu_custom_call.1
$region0: #{tpu_custom_call.1}
  #allocation0 [shape = 'u32[]', space=smem, size = 0x4, offset = 0x4, fixed_abs, tag = 'smem constant byte address 0x4 - core index']
  #allocation1 [shape = 'u32[72,128]{1,0:T(1,128)}', space=vmem, size = 0x9000, scoped, tag = 'internal scratch']
  %s0 = inlined_call_operand.hbm [shape: bf16[32,128], index: 0, kind: input, shape index: {}]
  %s1 = inlined_call_operand.hbm [shape: bf16[128,128], index: 1, kind: input, shape index: {}]
  %s2 = inlined_call_operand.vmem [shape: f32[1,128], index: 2, kind: input, shape index: {}]
  %s3 = inlined_call_operand.hbm [shape: f32[32,128], index: 3, kind: output, shape index: {}]
  %s4 = sld [smem:[#allocation0]]
  $region30: #{tpu_custom_call.1} parent=0
    _
  %s6 = ssub.s32 1, %s4
  %s7 = scalar_select 0, %s6, %s4
  $region1: #{tpu_custom_call.1} parent=0
    #allocation2 [shape = 'u8[8192]{0}', space=vmem, size = 0x2000, scoped, tag = 'input window, operand 0, single buffered']
    #allocation3 [shape = 's32[1]{0}', space=sflag, size = 0x4, scoped, tag = 'scoped memory for tpu_custom_call.1']
    #allocation4 [shape = 's32[1]{0}', space=sflag, size = 0x4, scoped, tag = 'scoped memory for tpu_custom_call.1']
    #allocation5 [shape = 'u8[32768]{0}', space=vmem, size = 0x8000, scoped, tag = 'input window, operand 1, single buffered']
    #allocation6 [shape = 's32[1]{0}', space=sflag, size = 0x4, scoped, tag = 'scoped memory for tpu_custom_call.1']
    #allocation7 [shape = 'u8[16384]{0}', space=vmem, size = 0x4000, scoped, tag = 'output window, operand 0, single buffered']
    %8 = vsyncpa [#allocation3], 0
    %9 = vsyncpa [#allocation6], 0
    %10 = vsyncpa [#allocation4], 0
    // Predicated region
    $region2: #{tpu_custom_call.1} parent=1 // pred_check
      _
    $region3: #{tpu_custom_call.1} parent=1 // pred_check_branch
      %12 = sbr.rel (0) target = $region5
    $region4: #{tpu_custom_call.1} parent=1 // pred_region
      %14 = vsyncadd [#allocation3], 0
      %s15 = sshll.u32 %s0, 4
      %s16 = int_to_ptr.hbm [resolvable:$true] %s15
      %s17 = sshll.u32 [#allocation2], 4
      %s18 = int_to_ptr.vmem [resolvable:$true] %s17
      %23 = dma.hbm_to_vmem [thread:$0]  %s16, 256, %s18, [#allocation3], 64, 64, 4
    $region5: #{tpu_custom_call.1} parent=1 // pred_fallthru
      _
    // Predicated region
    $region6: #{tpu_custom_call.1} parent=1 // pred_check
      _
    $region7: #{tpu_custom_call.1} parent=1 // pred_check_branch
      %25 = sbr.rel (0) target = $region9
    $region8: #{tpu_custom_call.1} parent=1 // pred_region
      %27 = vsyncadd [#allocation6], 0
      %s28 = sshll.u32 %s1, 4
      %s29 = int_to_ptr.hbm [resolvable:$true] %s28
      %s30 = sshll.u32 [#allocation5], 4
      %s31 = int_to_ptr.vmem [resolvable:$true] %s30
      %36 = dma.hbm_to_vmem [thread:$0]  %s29, 1024, %s31, [#allocation6], 64, 64, 4
    $region9: #{tpu_custom_call.1} parent=1 // pred_fallthru
      _
    // Predicated region
    $region10: #{tpu_custom_call.1} parent=1 // pred_check
      _
    $region11: #{tpu_custom_call.1} parent=1 // pred_check_branch
      %38 = sbr.rel (0) target = $region13
    $region12: #{tpu_custom_call.1} parent=1 // pred_region
      _
    $region13: #{tpu_custom_call.1} parent=1 // pred_fallthru
      _
    // Predicated region
    $region14: #{tpu_custom_call.1} parent=1 // pred_check
      _
    $region15: #{tpu_custom_call.1} parent=1 // pred_check_branch
      %40 = sbr.rel (0) target = $region17
    $region16: #{tpu_custom_call.1} parent=1 // pred_region
      %42 = dma.done [#allocation3], 256
    $region17: #{tpu_custom_call.1} parent=1 // pred_fallthru
      _
    // Predicated region
    $region18: #{tpu_custom_call.1} parent=1 // pred_check
      _
    $region19: #{tpu_custom_call.1} parent=1 // pred_check_branch
      %44 = sbr.rel (0) target = $region21
    $region20: #{tpu_custom_call.1} parent=1 // pred_region
      %46 = dma.done [#allocation6], 1024
    $region21: #{tpu_custom_call.1} parent=1 // pred_fallthru
      _
    %v47 = vld [vmem:[#allocation2] sm:$0xf]
    %v48 = vld [vmem:[#allocation2 + $0x4] sm:$0xf]
    %v49 = vld [vmem:[#allocation2 + $0x8] sm:$0xf]
    %v50 = vld [vmem:[#allocation2 + $0xc] sm:$0xf]
    %v51 = vld [vmem:[#allocation5] sm:$0xf]
    %v52 = vld [vmem:[#allocation5 + $0x4] sm:$0xf]
    %v53 = vld [vmem:[#allocation5 + $0x8] sm:$0xf]
    %v54 = vld [vmem:[#allocation5 + $0xc] sm:$0xf]
    %v55 = vld [vmem:[#allocation5 + $0x10] sm:$0xf]
    %v56 = vld [vmem:[#allocation5 + $0x14] sm:$0xf]
    %v57 = vld [vmem:[#allocation5 + $0x18] sm:$0xf]
    %v58 = vld [vmem:[#allocation5 + $0x1c] sm:$0xf]
    %v59 = vld [vmem:[#allocation5 + $0x20] sm:$0xf]
    %v60 = vld [vmem:[#allocation5 + $0x24] sm:$0xf]
    %v61 = vld [vmem:[#allocation5 + $0x28] sm:$0xf]
    %v62 = vld [vmem:[#allocation5 + $0x2c] sm:$0xf]
    %v63 = vld [vmem:[#allocation5 + $0x30] sm:$0xf]
    %v64 = vld [vmem:[#allocation5 + $0x34] sm:$0xf]
    %v65 = vld [vmem:[#allocation5 + $0x38] sm:$0xf]
    %v66 = vld [vmem:[#allocation5 + $0x3c] sm:$0xf]
    %v67 = vld [vmem:[%s2] sm:$0x1]
    %v69 = vperm.slane %v67, 0
    %v75 = vunpack.c.l.b16 %v47
    %v76 = vunpack.c.l.b16 %v48
    %v77 = vunpack.c.l.b16 %v49
    %v78 = vunpack.c.l.b16 %v50
    %v79 = vpack.c.b16 %v76, %v75
    %v80 = vpack.c.b16 %v78, %v77
    %v99 = vunpack.c.l.b16 %v51
    %v100 = vunpack.c.l.b16 %v52
    %v101 = vunpack.c.l.b16 %v53
    %v102 = vunpack.c.l.b16 %v54
    %v103 = vunpack.c.l.b16 %v55
    %v104 = vunpack.c.l.b16 %v56
    %v105 = vunpack.c.l.b16 %v57
    %v106 = vunpack.c.l.b16 %v58
    %v107 = vunpack.c.l.b16 %v59
    %v108 = vunpack.c.l.b16 %v60
    %v109 = vunpack.c.l.b16 %v61
    %v110 = vunpack.c.l.b16 %v62
    %v111 = vunpack.c.l.b16 %v63
    %v112 = vunpack.c.l.b16 %v64
    %v113 = vunpack.c.l.b16 %v65
    %v114 = vunpack.c.l.b16 %v66
    %v115 = vpack.c.b16 %v100, %v99
    %v116 = vpack.c.b16 %v102, %v101
    %v117 = vpack.c.b16 %v104, %v103
    %v118 = vpack.c.b16 %v106, %v105
    %v119 = vpack.c.b16 %v108, %v107
    %v120 = vpack.c.b16 %v110, %v109
    %v121 = vpack.c.b16 %v112, %v111
    %v122 = vpack.c.b16 %v114, %v113
    %131 = vmatpush.bf16.msra.mxu0 %v122
    %132 = vmatpush.bf16.msra.mxu0 %v121
    %133 = vmatpush.bf16.msra.mxu0 %v120
    %134 = vmatpush.bf16.msra.mxu0 %v119
    %135 = vmatpush.bf16.msra.mxu0 %v118
    %136 = vmatpush.bf16.msra.mxu0 %v117
    %137 = vmatpush.bf16.msra.mxu0 %v116
    %138 = vmatpush.bf16.msra.mxu0 %v115
    %139 = vmatmul.bf16.gmra.mxu0 %v79
    %v140 = vpop.f32.mrf.mxu0
    %v141 = vadd.f32 %v69, %v140
    %v142 = vpop.f32.mrf.mxu0
    %v143 = vadd.f32 %v69, %v142
    %144 = vmatmul.bf16.gmra.mxu0 %v80
    %v145 = vpop.f32.mrf.mxu0
    %v146 = vadd.f32 %v69, %v145
    %v147 = vpop.f32.mrf.mxu0
    %v148 = vadd.f32 %v69, %v147
    %149 = vdwg.mxu0
    %150 = vst [vmem:[#allocation7] sm:$0xff] %v141
    %151 = vst [vmem:[#allocation7 + $0x8] sm:$0xff] %v143
    %152 = vst [vmem:[#allocation7 + $0x10] sm:$0xff] %v146
    %153 = vst [vmem:[#allocation7 + $0x18] sm:$0xff] %v148
    // Predicated region
    $region22: #{tpu_custom_call.1} parent=1 // pred_check
      _
    $region23: #{tpu_custom_call.1} parent=1 // pred_check_branch
      %155 = sbr.rel (0) target = $region25
    $region24: #{tpu_custom_call.1} parent=1 // pred_region
      %157 = vsyncadd [#allocation4], 0
      %s158 = sshll.u32 [#allocation7], 4
      %s159 = int_to_ptr.vmem [resolvable:$true] %s158
      %s160 = sshll.u32 %s3, 4
      %s161 = int_to_ptr.hbm [resolvable:$true] %s160
      %166 = dma.vmem_to_hbm [thread:$0]  %s159, 512, %s161, [#allocation4], 128, 128, 8
    $region25: #{tpu_custom_call.1} parent=1 // pred_fallthru
      _
    // Predicated region
    $region26: #{tpu_custom_call.1} parent=1 // pred_check
      _
    $region27: #{tpu_custom_call.1} parent=1 // pred_check_branch
      %168 = sbr.rel (0) target = $region29
    $region28: #{tpu_custom_call.1} parent=1 // pred_region
      %170 = dma.done [#allocation4], 512
    $region29: #{tpu_custom_call.1} parent=1 // pred_fallthru
      _
    %171 = vsyncpa [#allocation3], 1
    %172 = vsyncpa [#allocation6], 1
    %173 = vsyncpa [#allocation4], 1

</llo_original>
